<compile_context>
chip_gen: v7x
topology: tpu7x:2x2x1
jax: 0.10.0
libtpu: 0.0.40
codegen_flags: <defaults>
</compile_context>

<pallas_src>
import jax
import jax.numpy as jnp
from jax import lax
from jax.experimental import pallas as pl
from jax.experimental.pallas import tpu as pltpu

EPS = 1e-6
FEATURES = 5
LANES = 128


def _round_up(a, b):
    return ((a + b - 1) // b) * b


def _make_kernel(feat: int, chunk: int, unroll: int):
    """Build the fused kernel for a given feature count and inner chunk size."""

    def kernel(x_ref, w1_ref, b1_ref, lnw_ref, lnb_ref, w2_ref, b2_ref, o_ref):
        # x_ref / o_ref: (feat, tile_r, 128) VMEM blocks, batch on the lanes.
        # Weight refs live whole in SMEM; read element-wise as scalars.
        tile_r = x_ref.shape[1]
        n_chunks = tile_r // chunk
        inv_f = 1.0 / feat

        # Hoist every SMEM scalar read out of the chunk loop: JAX does not CSE
        # scalar loads/broadcasts across traced loop iterations, so without
        # this the ~70 sld's would be re-issued in every chunk.
        w1 = [[w1_ref[j, i] for i in range(feat)] for j in range(feat)]
        b1 = [b1_ref[j] for j in range(feat)]
        lnw = [lnw_ref[j] for j in range(feat)]
        lnb = [lnb_ref[j] for j in range(feat)]
        w2 = [[w2_ref[j, i] for i in range(feat)] for j in range(feat)]
        b2 = [b2_ref[j] for j in range(feat)]

        def chunk_body(c):
            start = c * chunk
            if not isinstance(start, int):
                start = pl.multiple_of(start, chunk)
            rs = pl.ds(start, chunk)

            # fc1 + ReLU as unrolled VPU FMAs in outer-product accumulation
            # order: only one input feature slab is live at a time.
            hs = None
            for i in range(feat):
                xi = x_ref[i, rs, :]
                if hs is None:
                    hs = [xi * w1[j][i] + b1[j] for j in range(feat)]
                else:
                    hs = [hs[j] + xi * w1[j][i] for j in range(feat)]
            hs = [jnp.maximum(h, 0.0) for h in hs]

            # LayerNorm over the (unrolled) feature axis: biased variance,
            # eps added to std (matches the PyTorch module exactly).
            mean = hs[0]
            for j in range(1, feat):
                mean = mean + hs[j]
            mean = mean * inv_f
            cen = [hs[j] - mean for j in range(feat)]   # reused below
            var = cen[0] * cen[0]
            for j in range(1, feat):
                var = var + cen[j] * cen[j]
            var = var * inv_f
            std = jnp.sqrt(var)                               # EUP
            inv_std = pl.reciprocal(std + EPS, approx=False)  # EUP, exact

            ys = [jnp.maximum(cen[j] * inv_std * lnw[j] + lnb[j], 0.0)
                  for j in range(feat)]

            # fc2 (outer-product accumulation) + lane-dense stores.
            acc = None
            for i in range(feat):
                yi = ys[i]
                if acc is None:
                    acc = [yi * w2[j][i] + b2[j] for j in range(feat)]
                else:
                    acc = [acc[j] + yi * w2[j][i] for j in range(feat)]
            for j in range(feat):
                o_ref[j, rs, :] = acc[j].astype(o_ref.dtype)

        if n_chunks == 1:
            chunk_body(0)
        else:
            def loop_body(c, carry):
                chunk_body(c)
                return carry
            lax.fori_loop(0, n_chunks, loop_body, 0,
                          unroll=min(unroll, n_chunks))

    return kernel


def mlp_norm_forward(x, w1, b1, ln_w, ln_b, w2, b2,
                     *, block_rows=1024, chunk_rows=32, inner_unroll=4):
    """x: (batch, 5) float32. Returns (out, None) like the PyTorch module.

    NOTE: for tiny batches a plain XLA fusion beats any custom kernel (fixed
    per-step + dispatch overhead); the Pallas path is kept unconditionally
    here to exercise the kernel.
    """
    batch, feat = x.shape

    rows = max(1, pl.cdiv(batch, LANES))          # batch rows of 128 lanes
    chunk = min(chunk_rows, rows)
    rows_c = _round_up(rows, chunk)               # pad only to chunk multiple
    n_chunks = rows_c // chunk

    block_chunks = max(1, block_rows // chunk)
    num_tiles = pl.cdiv(n_chunks, block_chunks)
    if n_chunks >= 2:
        num_tiles = max(num_tiles, 2)             # keep both v7x TCs busy
        if num_tiles % 2:
            num_tiles += 1                        # even tile count across 2 TCs
    tile_chunks = pl.cdiv(n_chunks, num_tiles)
    tile_r = tile_chunks * chunk                  # multiple of chunk (and of 8
                                                  # whenever rows > chunk)
    rows_pad = num_tiles * tile_r
    b_pad = rows_pad * LANES

    # Lane-dense, zero-padded, transposed activations: (F, rows_pad, 128).
    # pad-of-transpose fuses in XLA (no zeros+scatter materialization).
    # TODO(synk): in a real pipeline keep activations in this layout across
    # adjacent ops so the wrapper transpose/un-transpose HBM trips disappear.
    xt = jnp.pad(x.T, ((0, 0), (0, b_pad - batch))).reshape(
        feat, rows_pad, LANES)

    act_spec = pl.BlockSpec((feat, tile_r, LANES), lambda g: (0, g, 0))
    smem_spec = pl.BlockSpec(memory_space=pltpu.MemorySpace.SMEM)

    out_t = pl.pallas_call(
        _make_kernel(feat, chunk, inner_unroll),
        out_shape=jax.ShapeDtypeStruct((feat, rows_pad, LANES), x.dtype),
        grid=(num_tiles,),
        in_specs=[act_spec] + [smem_spec] * 6,
        out_specs=act_spec,
        compiler_params=pltpu.CompilerParams(
            dimension_semantics=("parallel",),      # shard tiles across TCs (v7x)
            vmem_limit_bytes=32 * 1024 * 1024,      # ~10.5 MB used at 1024-row tiles
        ),
    )(xt, w1, b1, ln_w, ln_b, w2, b2)

    out = out_t.reshape(feat, b_pad)[:, :batch].T
    return out, None


def _reference(x, w1, b1, ln_w, ln_b, w2, b2):
    h = jnp.maximum(x @ w1.T + b1, 0.0)
    mean = jnp.mean(h, axis=-1, keepdims=True)
    std = jnp.sqrt(jnp.mean((h - mean) ** 2, axis=-1, keepdims=True))
    n = (h - mean) / (std + EPS)
    y = jnp.maximum(ln_w * n + ln_b, 0.0)
    return y @ w2.T + b2


if __name__ == "__main__":
    key = jax.random.PRNGKey(0)
    k_x, k_w1, k_b1, k_w2, k_b2 = jax.random.split(key, 5)

    batch = 8
    x = jax.random.normal(k_x, (batch, FEATURES), dtype=jnp.float32)

    # Deterministic synthetic parameters (shapes per module __init__).
    w1 = 0.3 * jax.random.normal(k_w1, (FEATURES, FEATURES), dtype=jnp.float32)
    b1 = 0.1 * jax.random.normal(k_b1, (FEATURES,), dtype=jnp.float32)
    ln_w = jnp.ones((FEATURES,), dtype=jnp.float32)    # LayerNorm.weight init
    ln_b = jnp.zeros((FEATURES,), dtype=jnp.float32)   # LayerNorm.bias init
    w2 = 0.3 * jax.random.normal(k_w2, (FEATURES, FEATURES), dtype=jnp.float32)
    b2 = 0.1 * jax.random.normal(k_b2, (FEATURES,), dtype=jnp.float32)

    out, aux = mlp_norm_forward(x, w1, b1, ln_w, ln_b, w2, b2)
    out = jax.block_until_ready(out)

    ref = _reference(x, w1, b1, ln_w, ln_b, w2, b2)
    assert out.shape == (batch, FEATURES)
    assert aux is None
    assert jnp.allclose(out, ref, atol=1e-5, rtol=1e-5), "mismatch vs reference"

    # Exercise a multi-tile, multi-chunk configuration as well.
    batch2 = 8320                                   # 65 rows of 128 lanes
    x2 = jax.random.normal(k_x, (batch2, FEATURES), dtype=jnp.float32)
    out2, _ = mlp_norm_forward(x2, w1, b1, ln_w, ln_b, w2, b2)
    out2 = jax.block_until_ready(out2)
    ref2 = _reference(x2, w1, b1, ln_w, ln_b, w2, b2)
    assert jnp.allclose(out2, ref2, atol=1e-5, rtol=1e-5), "mismatch (large batch)"

    print("KERNEL_OK")
</pallas_src>

<mosaic_0001>
module attributes {stable_mosaic.version = 11 : i64} {
  func.func @kernel(%arg0: i32, %arg1: memref<5x1x128xf32, #tpu.memory_space<vmem>>, %arg2: memref<5x5xf32, #tpu.memory_space<smem>>, %arg3: memref<5xf32, #tpu.memory_space<smem>>, %arg4: memref<5xf32, #tpu.memory_space<smem>>, %arg5: memref<5xf32, #tpu.memory_space<smem>>, %arg6: memref<5x5xf32, #tpu.memory_space<smem>>, %arg7: memref<5xf32, #tpu.memory_space<smem>>, %arg8: memref<5x1x128xf32, #tpu.memory_space<vmem>>) attributes {dimension_semantics = [#tpu.dimension_semantics<parallel>], iteration_bounds = array<i64: 1>, scalar_prefetch = 0 : i64, scratch_operands = 0 : i64, tpu.core_type = #tpu.core_type<tc>, window_params = [{transform_indices = @transform_0, window_bounds = array<i64: 5, 1, 128>}, {transform_indices = @transform_1, window_bounds = array<i64: 5, 5>}, {transform_indices = @transform_2, window_bounds = array<i64: 5>}, {transform_indices = @transform_3, window_bounds = array<i64: 5>}, {transform_indices = @transform_4, window_bounds = array<i64: 5>}, {transform_indices = @transform_5, window_bounds = array<i64: 5, 5>}, {transform_indices = @transform_6, window_bounds = array<i64: 5>}, {transform_indices = @transform_7, window_bounds = array<i64: 5, 1, 128>}]} {
    %c0 = arith.constant 0 : index
    %c0_0 = arith.constant 0 : index
    %0 = memref.load %arg2[%c0, %c0_0] : memref<5x5xf32, #tpu.memory_space<smem>>
    %c0_1 = arith.constant 0 : index
    %c1 = arith.constant 1 : index
    %1 = memref.load %arg2[%c0_1, %c1] : memref<5x5xf32, #tpu.memory_space<smem>>
    %c0_2 = arith.constant 0 : index
    %c2 = arith.constant 2 : index
    %2 = memref.load %arg2[%c0_2, %c2] : memref<5x5xf32, #tpu.memory_space<smem>>
    %c0_3 = arith.constant 0 : index
    %c3 = arith.constant 3 : index
    %3 = memref.load %arg2[%c0_3, %c3] : memref<5x5xf32, #tpu.memory_space<smem>>
    %c0_4 = arith.constant 0 : index
    %c4 = arith.constant 4 : index
    %4 = memref.load %arg2[%c0_4, %c4] : memref<5x5xf32, #tpu.memory_space<smem>>
    %c1_5 = arith.constant 1 : index
    %c0_6 = arith.constant 0 : index
    %5 = memref.load %arg2[%c1_5, %c0_6] : memref<5x5xf32, #tpu.memory_space<smem>>
    %c1_7 = arith.constant 1 : index
    %c1_8 = arith.constant 1 : index
    %6 = memref.load %arg2[%c1_7, %c1_8] : memref<5x5xf32, #tpu.memory_space<smem>>
    %c1_9 = arith.constant 1 : index
    %c2_10 = arith.constant 2 : index
    %7 = memref.load %arg2[%c1_9, %c2_10] : memref<5x5xf32, #tpu.memory_space<smem>>
    %c1_11 = arith.constant 1 : index
    %c3_12 = arith.constant 3 : index
    %8 = memref.load %arg2[%c1_11, %c3_12] : memref<5x5xf32, #tpu.memory_space<smem>>
    %c1_13 = arith.constant 1 : index
    %c4_14 = arith.constant 4 : index
    %9 = memref.load %arg2[%c1_13, %c4_14] : memref<5x5xf32, #tpu.memory_space<smem>>
    %c2_15 = arith.constant 2 : index
    %c0_16 = arith.constant 0 : index
    %10 = memref.load %arg2[%c2_15, %c0_16] : memref<5x5xf32, #tpu.memory_space<smem>>
    %c2_17 = arith.constant 2 : index
    %c1_18 = arith.constant 1 : index
    %11 = memref.load %arg2[%c2_17, %c1_18] : memref<5x5xf32, #tpu.memory_space<smem>>
    %c2_19 = arith.constant 2 : index
    %c2_20 = arith.constant 2 : index
    %12 = memref.load %arg2[%c2_19, %c2_20] : memref<5x5xf32, #tpu.memory_space<smem>>
    %c2_21 = arith.constant 2 : index
    %c3_22 = arith.constant 3 : index
    %13 = memref.load %arg2[%c2_21, %c3_22] : memref<5x5xf32, #tpu.memory_space<smem>>
    %c2_23 = arith.constant 2 : index
    %c4_24 = arith.constant 4 : index
    %14 = memref.load %arg2[%c2_23, %c4_24] : memref<5x5xf32, #tpu.memory_space<smem>>
    %c3_25 = arith.constant 3 : index
    %c0_26 = arith.constant 0 : index
    %15 = memref.load %arg2[%c3_25, %c0_26] : memref<5x5xf32, #tpu.memory_space<smem>>
    %c3_27 = arith.constant 3 : index
    %c1_28 = arith.constant 1 : index
    %16 = memref.load %arg2[%c3_27, %c1_28] : memref<5x5xf32, #tpu.memory_space<smem>>
    %c3_29 = arith.constant 3 : index
    %c2_30 = arith.constant 2 : index
    %17 = memref.load %arg2[%c3_29, %c2_30] : memref<5x5xf32, #tpu.memory_space<smem>>
    %c3_31 = arith.constant 3 : index
    %c3_32 = arith.constant 3 : index
    %18 = memref.load %arg2[%c3_31, %c3_32] : memref<5x5xf32, #tpu.memory_space<smem>>
    %c3_33 = arith.constant 3 : index
    %c4_34 = arith.constant 4 : index
    %19 = memref.load %arg2[%c3_33, %c4_34] : memref<5x5xf32, #tpu.memory_space<smem>>
    %c4_35 = arith.constant 4 : index
    %c0_36 = arith.constant 0 : index
    %20 = memref.load %arg2[%c4_35, %c0_36] : memref<5x5xf32, #tpu.memory_space<smem>>
    %c4_37 = arith.constant 4 : index
    %c1_38 = arith.constant 1 : index
    %21 = memref.load %arg2[%c4_37, %c1_38] : memref<5x5xf32, #tpu.memory_space<smem>>
    %c4_39 = arith.constant 4 : index
    %c2_40 = arith.constant 2 : index
    %22 = memref.load %arg2[%c4_39, %c2_40] : memref<5x5xf32, #tpu.memory_space<smem>>
    %c4_41 = arith.constant 4 : index
    %c3_42 = arith.constant 3 : index
    %23 = memref.load %arg2[%c4_41, %c3_42] : memref<5x5xf32, #tpu.memory_space<smem>>
    %c4_43 = arith.constant 4 : index
    %c4_44 = arith.constant 4 : index
    %24 = memref.load %arg2[%c4_43, %c4_44] : memref<5x5xf32, #tpu.memory_space<smem>>
    %c0_45 = arith.constant 0 : index
    %25 = memref.load %arg3[%c0_45] : memref<5xf32, #tpu.memory_space<smem>>
    %c1_46 = arith.constant 1 : index
    %26 = memref.load %arg3[%c1_46] : memref<5xf32, #tpu.memory_space<smem>>
    %c2_47 = arith.constant 2 : index
    %27 = memref.load %arg3[%c2_47] : memref<5xf32, #tpu.memory_space<smem>>
    %c3_48 = arith.constant 3 : index
    %28 = memref.load %arg3[%c3_48] : memref<5xf32, #tpu.memory_space<smem>>
    %c4_49 = arith.constant 4 : index
    %29 = memref.load %arg3[%c4_49] : memref<5xf32, #tpu.memory_space<smem>>
    %c0_50 = arith.constant 0 : index
    %30 = memref.load %arg4[%c0_50] : memref<5xf32, #tpu.memory_space<smem>>
    %c1_51 = arith.constant 1 : index
    %31 = memref.load %arg4[%c1_51] : memref<5xf32, #tpu.memory_space<smem>>
    %c2_52 = arith.constant 2 : index
    %32 = memref.load %arg4[%c2_52] : memref<5xf32, #tpu.memory_space<smem>>
    %c3_53 = arith.constant 3 : index
    %33 = memref.load %arg4[%c3_53] : memref<5xf32, #tpu.memory_space<smem>>
    %c4_54 = arith.constant 4 : index
    %34 = memref.load %arg4[%c4_54] : memref<5xf32, #tpu.memory_space<smem>>
    %c0_55 = arith.constant 0 : index
    %35 = memref.load %arg5[%c0_55] : memref<5xf32, #tpu.memory_space<smem>>
    %c1_56 = arith.constant 1 : index
    %36 = memref.load %arg5[%c1_56] : memref<5xf32, #tpu.memory_space<smem>>
    %c2_57 = arith.constant 2 : index
    %37 = memref.load %arg5[%c2_57] : memref<5xf32, #tpu.memory_space<smem>>
    %c3_58 = arith.constant 3 : index
    %38 = memref.load %arg5[%c3_58] : memref<5xf32, #tpu.memory_space<smem>>
    %c4_59 = arith.constant 4 : index
    %39 = memref.load %arg5[%c4_59] : memref<5xf32, #tpu.memory_space<smem>>
    %c0_60 = arith.constant 0 : index
    %c0_61 = arith.constant 0 : index
    %40 = memref.load %arg6[%c0_60, %c0_61] : memref<5x5xf32, #tpu.memory_space<smem>>
    %c0_62 = arith.constant 0 : index
    %c1_63 = arith.constant 1 : index
    %41 = memref.load %arg6[%c0_62, %c1_63] : memref<5x5xf32, #tpu.memory_space<smem>>
    %c0_64 = arith.constant 0 : index
    %c2_65 = arith.constant 2 : index
    %42 = memref.load %arg6[%c0_64, %c2_65] : memref<5x5xf32, #tpu.memory_space<smem>>
    %c0_66 = arith.constant 0 : index
    %c3_67 = arith.constant 3 : index
    %43 = memref.load %arg6[%c0_66, %c3_67] : memref<5x5xf32, #tpu.memory_space<smem>>
    %c0_68 = arith.constant 0 : index
    %c4_69 = arith.constant 4 : index
    %44 = memref.load %arg6[%c0_68, %c4_69] : memref<5x5xf32, #tpu.memory_space<smem>>
    %c1_70 = arith.constant 1 : index
    %c0_71 = arith.constant 0 : index
    %45 = memref.load %arg6[%c1_70, %c0_71] : memref<5x5xf32, #tpu.memory_space<smem>>
    %c1_72 = arith.constant 1 : index
    %c1_73 = arith.constant 1 : index
    %46 = memref.load %arg6[%c1_72, %c1_73] : memref<5x5xf32, #tpu.memory_space<smem>>
    %c1_74 = arith.constant 1 : index
    %c2_75 = arith.constant 2 : index
    %47 = memref.load %arg6[%c1_74, %c2_75] : memref<5x5xf32, #tpu.memory_space<smem>>
    %c1_76 = arith.constant 1 : index
    %c3_77 = arith.constant 3 : index
    %48 = memref.load %arg6[%c1_76, %c3_77] : memref<5x5xf32, #tpu.memory_space<smem>>
    %c1_78 = arith.constant 1 : index
    %c4_79 = arith.constant 4 : index
    %49 = memref.load %arg6[%c1_78, %c4_79] : memref<5x5xf32, #tpu.memory_space<smem>>
    %c2_80 = arith.constant 2 : index
    %c0_81 = arith.constant 0 : index
    %50 = memref.load %arg6[%c2_80, %c0_81] : memref<5x5xf32, #tpu.memory_space<smem>>
    %c2_82 = arith.constant 2 : index
    %c1_83 = arith.constant 1 : index
    %51 = memref.load %arg6[%c2_82, %c1_83] : memref<5x5xf32, #tpu.memory_space<smem>>
    %c2_84 = arith.constant 2 : index
    %c2_85 = arith.constant 2 : index
    %52 = memref.load %arg6[%c2_84, %c2_85] : memref<5x5xf32, #tpu.memory_space<smem>>
    %c2_86 = arith.constant 2 : index
    %c3_87 = arith.constant 3 : index
    %53 = memref.load %arg6[%c2_86, %c3_87] : memref<5x5xf32, #tpu.memory_space<smem>>
    %c2_88 = arith.constant 2 : index
    %c4_89 = arith.constant 4 : index
    %54 = memref.load %arg6[%c2_88, %c4_89] : memref<5x5xf32, #tpu.memory_space<smem>>
    %c3_90 = arith.constant 3 : index
    %c0_91 = arith.constant 0 : index
    %55 = memref.load %arg6[%c3_90, %c0_91] : memref<5x5xf32, #tpu.memory_space<smem>>
    %c3_92 = arith.constant 3 : index
    %c1_93 = arith.constant 1 : index
    %56 = memref.load %arg6[%c3_92, %c1_93] : memref<5x5xf32, #tpu.memory_space<smem>>
    %c3_94 = arith.constant 3 : index
    %c2_95 = arith.constant 2 : index
    %57 = memref.load %arg6[%c3_94, %c2_95] : memref<5x5xf32, #tpu.memory_space<smem>>
    %c3_96 = arith.constant 3 : index
    %c3_97 = arith.constant 3 : index
    %58 = memref.load %arg6[%c3_96, %c3_97] : memref<5x5xf32, #tpu.memory_space<smem>>
    %c3_98 = arith.constant 3 : index
    %c4_99 = arith.constant 4 : index
    %59 = memref.load %arg6[%c3_98, %c4_99] : memref<5x5xf32, #tpu.memory_space<smem>>
    %c4_100 = arith.constant 4 : index
    %c0_101 = arith.constant 0 : index
    %60 = memref.load %arg6[%c4_100, %c0_101] : memref<5x5xf32, #tpu.memory_space<smem>>
    %c4_102 = arith.constant 4 : index
    %c1_103 = arith.constant 1 : index
    %61 = memref.load %arg6[%c4_102, %c1_103] : memref<5x5xf32, #tpu.memory_space<smem>>
    %c4_104 = arith.constant 4 : index
    %c2_105 = arith.constant 2 : index
    %62 = memref.load %arg6[%c4_104, %c2_105] : memref<5x5xf32, #tpu.memory_space<smem>>
    %c4_106 = arith.constant 4 : index
    %c3_107 = arith.constant 3 : index
    %63 = memref.load %arg6[%c4_106, %c3_107] : memref<5x5xf32, #tpu.memory_space<smem>>
    %c4_108 = arith.constant 4 : index
    %c4_109 = arith.constant 4 : index
    %64 = memref.load %arg6[%c4_108, %c4_109] : memref<5x5xf32, #tpu.memory_space<smem>>
    %c0_110 = arith.constant 0 : index
    %65 = memref.load %arg7[%c0_110] : memref<5xf32, #tpu.memory_space<smem>>
    %c1_111 = arith.constant 1 : index
    %66 = memref.load %arg7[%c1_111] : memref<5xf32, #tpu.memory_space<smem>>
    %c2_112 = arith.constant 2 : index
    %67 = memref.load %arg7[%c2_112] : memref<5xf32, #tpu.memory_space<smem>>
    %c3_113 = arith.constant 3 : index
    %68 = memref.load %arg7[%c3_113] : memref<5xf32, #tpu.memory_space<smem>>
    %c4_114 = arith.constant 4 : index
    %69 = memref.load %arg7[%c4_114] : memref<5xf32, #tpu.memory_space<smem>>
    %c0_115 = arith.constant 0 : index
    %c0_116 = arith.constant 0 : index
    %c0_117 = arith.constant 0 : index
    %70 = vector.load %arg1[%c0_115, %c0_116, %c0_117] : memref<5x1x128xf32, #tpu.memory_space<vmem>>, vector<1x1x128xf32>
    %71 = vector.shape_cast %70 : vector<1x1x128xf32> to vector<1x128xf32>
    %72 = vector.broadcast %0 : f32 to vector<1x128xf32>
    %73 = arith.mulf %71, %72 : vector<1x128xf32>
    %74 = vector.broadcast %25 : f32 to vector<1x128xf32>
    %75 = arith.addf %73, %74 : vector<1x128xf32>
    %76 = vector.broadcast %5 : f32 to vector<1x128xf32>
    %77 = arith.mulf %71, %76 : vector<1x128xf32>
    %78 = vector.broadcast %26 : f32 to vector<1x128xf32>
    %79 = arith.addf %77, %78 : vector<1x128xf32>
    %80 = vector.broadcast %10 : f32 to vector<1x128xf32>
    %81 = arith.mulf %71, %80 : vector<1x128xf32>
    %82 = vector.broadcast %27 : f32 to vector<1x128xf32>
    %83 = arith.addf %81, %82 : vector<1x128xf32>
    %84 = vector.broadcast %15 : f32 to vector<1x128xf32>
    %85 = arith.mulf %71, %84 : vector<1x128xf32>
    %86 = vector.broadcast %28 : f32 to vector<1x128xf32>
    %87 = arith.addf %85, %86 : vector<1x128xf32>
    %88 = vector.broadcast %20 : f32 to vector<1x128xf32>
    %89 = arith.mulf %71, %88 : vector<1x128xf32>
    %90 = vector.broadcast %29 : f32 to vector<1x128xf32>
    %91 = arith.addf %89, %90 : vector<1x128xf32>
    %c1_118 = arith.constant 1 : index
    %c0_119 = arith.constant 0 : index
    %c0_120 = arith.constant 0 : index
    %92 = vector.load %arg1[%c1_118, %c0_119, %c0_120] : memref<5x1x128xf32, #tpu.memory_space<vmem>>, vector<1x1x128xf32>
    %93 = vector.shape_cast %92 : vector<1x1x128xf32> to vector<1x128xf32>
    %94 = vector.broadcast %1 : f32 to vector<1x128xf32>
    %95 = arith.mulf %93, %94 : vector<1x128xf32>
    %96 = arith.addf %75, %95 : vector<1x128xf32>
    %97 = vector.broadcast %6 : f32 to vector<1x128xf32>
    %98 = arith.mulf %93, %97 : vector<1x128xf32>
    %99 = arith.addf %79, %98 : vector<1x128xf32>
    %100 = vector.broadcast %11 : f32 to vector<1x128xf32>
    %101 = arith.mulf %93, %100 : vector<1x128xf32>
    %102 = arith.addf %83, %101 : vector<1x128xf32>
    %103 = vector.broadcast %16 : f32 to vector<1x128xf32>
    %104 = arith.mulf %93, %103 : vector<1x128xf32>
    %105 = arith.addf %87, %104 : vector<1x128xf32>
    %106 = vector.broadcast %21 : f32 to vector<1x128xf32>
    %107 = arith.mulf %93, %106 : vector<1x128xf32>
    %108 = arith.addf %91, %107 : vector<1x128xf32>
    %c2_121 = arith.constant 2 : index
    %c0_122 = arith.constant 0 : index
    %c0_123 = arith.constant 0 : index
    %109 = vector.load %arg1[%c2_121, %c0_122, %c0_123] : memref<5x1x128xf32, #tpu.memory_space<vmem>>, vector<1x1x128xf32>
    %110 = vector.shape_cast %109 : vector<1x1x128xf32> to vector<1x128xf32>
    %111 = vector.broadcast %2 : f32 to vector<1x128xf32>
    %112 = arith.mulf %110, %111 : vector<1x128xf32>
    %113 = arith.addf %96, %112 : vector<1x128xf32>
    %114 = vector.broadcast %7 : f32 to vector<1x128xf32>
    %115 = arith.mulf %110, %114 : vector<1x128xf32>
    %116 = arith.addf %99, %115 : vector<1x128xf32>
    %117 = vector.broadcast %12 : f32 to vector<1x128xf32>
    %118 = arith.mulf %110, %117 : vector<1x128xf32>
    %119 = arith.addf %102, %118 : vector<1x128xf32>
    %120 = vector.broadcast %17 : f32 to vector<1x128xf32>
    %121 = arith.mulf %110, %120 : vector<1x128xf32>
    %122 = arith.addf %105, %121 : vector<1x128xf32>
    %123 = vector.broadcast %22 : f32 to vector<1x128xf32>
    %124 = arith.mulf %110, %123 : vector<1x128xf32>
    %125 = arith.addf %108, %124 : vector<1x128xf32>
    %c3_124 = arith.constant 3 : index
    %c0_125 = arith.constant 0 : index
    %c0_126 = arith.constant 0 : index
    %126 = vector.load %arg1[%c3_124, %c0_125, %c0_126] : memref<5x1x128xf32, #tpu.memory_space<vmem>>, vector<1x1x128xf32>
    %127 = vector.shape_cast %126 : vector<1x1x128xf32> to vector<1x128xf32>
    %128 = vector.broadcast %3 : f32 to vector<1x128xf32>
    %129 = arith.mulf %127, %128 : vector<1x128xf32>
    %130 = arith.addf %113, %129 : vector<1x128xf32>
    %131 = vector.broadcast %8 : f32 to vector<1x128xf32>
    %132 = arith.mulf %127, %131 : vector<1x128xf32>
    %133 = arith.addf %116, %132 : vector<1x128xf32>
    %134 = vector.broadcast %13 : f32 to vector<1x128xf32>
    %135 = arith.mulf %127, %134 : vector<1x128xf32>
    %136 = arith.addf %119, %135 : vector<1x128xf32>
    %137 = vector.broadcast %18 : f32 to vector<1x128xf32>
    %138 = arith.mulf %127, %137 : vector<1x128xf32>
    %139 = arith.addf %122, %138 : vector<1x128xf32>
    %140 = vector.broadcast %23 : f32 to vector<1x128xf32>
    %141 = arith.mulf %127, %140 : vector<1x128xf32>
    %142 = arith.addf %125, %141 : vector<1x128xf32>
    %c4_127 = arith.constant 4 : index
    %c0_128 = arith.constant 0 : index
    %c0_129 = arith.constant 0 : index
    %143 = vector.load %arg1[%c4_127, %c0_128, %c0_129] : memref<5x1x128xf32, #tpu.memory_space<vmem>>, vector<1x1x128xf32>
    %144 = vector.shape_cast %143 : vector<1x1x128xf32> to vector<1x128xf32>
    %145 = vector.broadcast %4 : f32 to vector<1x128xf32>
    %146 = arith.mulf %144, %145 : vector<1x128xf32>
    %147 = arith.addf %130, %146 : vector<1x128xf32>
    %148 = vector.broadcast %9 : f32 to vector<1x128xf32>
    %149 = arith.mulf %144, %148 : vector<1x128xf32>
    %150 = arith.addf %133, %149 : vector<1x128xf32>
    %151 = vector.broadcast %14 : f32 to vector<1x128xf32>
    %152 = arith.mulf %144, %151 : vector<1x128xf32>
    %153 = arith.addf %136, %152 : vector<1x128xf32>
    %154 = vector.broadcast %19 : f32 to vector<1x128xf32>
    %155 = arith.mulf %144, %154 : vector<1x128xf32>
    %156 = arith.addf %139, %155 : vector<1x128xf32>
    %157 = vector.broadcast %24 : f32 to vector<1x128xf32>
    %158 = arith.mulf %144, %157 : vector<1x128xf32>
    %159 = arith.addf %142, %158 : vector<1x128xf32>
    %cst = arith.constant 0.000000e+00 : f32
    %160 = vector.broadcast %cst : f32 to vector<1x128xf32>
    %161 = arith.maximumf %147, %160 : vector<1x128xf32>
    %cst_130 = arith.constant 0.000000e+00 : f32
    %162 = vector.broadcast %cst_130 : f32 to vector<1x128xf32>
    %163 = arith.maximumf %150, %162 : vector<1x128xf32>
    %cst_131 = arith.constant 0.000000e+00 : f32
    %164 = vector.broadcast %cst_131 : f32 to vector<1x128xf32>
    %165 = arith.maximumf %153, %164 : vector<1x128xf32>
    %cst_132 = arith.constant 0.000000e+00 : f32
    %166 = vector.broadcast %cst_132 : f32 to vector<1x128xf32>
    %167 = arith.maximumf %156, %166 : vector<1x128xf32>
    %cst_133 = arith.constant 0.000000e+00 : f32
    %168 = vector.broadcast %cst_133 : f32 to vector<1x128xf32>
    %169 = arith.maximumf %159, %168 : vector<1x128xf32>
    %170 = arith.addf %161, %163 : vector<1x128xf32>
    %171 = arith.addf %170, %165 : vector<1x128xf32>
    %172 = arith.addf %171, %167 : vector<1x128xf32>
    %173 = arith.addf %172, %169 : vector<1x128xf32>
    %cst_134 = arith.constant 2.000000e-01 : f32
    %174 = vector.broadcast %cst_134 : f32 to vector<1x128xf32>
    %175 = arith.mulf %173, %174 : vector<1x128xf32>
    %176 = arith.subf %161, %175 : vector<1x128xf32>
    %177 = arith.subf %163, %175 : vector<1x128xf32>
    %178 = arith.subf %165, %175 : vector<1x128xf32>
    %179 = arith.subf %167, %175 : vector<1x128xf32>
    %180 = arith.subf %169, %175 : vector<1x128xf32>
    %181 = arith.mulf %176, %176 : vector<1x128xf32>
    %182 = arith.mulf %177, %177 : vector<1x128xf32>
    %183 = arith.addf %181, %182 : vector<1x128xf32>
    %184 = arith.mulf %178, %178 : vector<1x128xf32>
    %185 = arith.addf %183, %184 : vector<1x128xf32>
    %186 = arith.mulf %179, %179 : vector<1x128xf32>
    %187 = arith.addf %185, %186 : vector<1x128xf32>
    %188 = arith.mulf %180, %180 : vector<1x128xf32>
    %189 = arith.addf %187, %188 : vector<1x128xf32>
    %cst_135 = arith.constant 2.000000e-01 : f32
    %190 = vector.broadcast %cst_135 : f32 to vector<1x128xf32>
    %191 = arith.mulf %189, %190 : vector<1x128xf32>
    %192 = math.sqrt %191 : vector<1x128xf32>
    %cst_136 = arith.constant 9.99999997E-7 : f32
    %193 = vector.broadcast %cst_136 : f32 to vector<1x128xf32>
    %194 = arith.addf %192, %193 : vector<1x128xf32>
    %195 = tpu.reciprocal %194 : vector<1x128xf32> -> vector<1x128xf32>
    %196 = arith.mulf %176, %195 : vector<1x128xf32>
    %197 = vector.broadcast %30 : f32 to vector<1x128xf32>
    %198 = arith.mulf %196, %197 : vector<1x128xf32>
    %199 = vector.broadcast %35 : f32 to vector<1x128xf32>
    %200 = arith.addf %198, %199 : vector<1x128xf32>
    %cst_137 = arith.constant 0.000000e+00 : f32
    %201 = vector.broadcast %cst_137 : f32 to vector<1x128xf32>
    %202 = arith.maximumf %200, %201 : vector<1x128xf32>
    %203 = arith.mulf %177, %195 : vector<1x128xf32>
    %204 = vector.broadcast %31 : f32 to vector<1x128xf32>
    %205 = arith.mulf %203, %204 : vector<1x128xf32>
    %206 = vector.broadcast %36 : f32 to vector<1x128xf32>
    %207 = arith.addf %205, %206 : vector<1x128xf32>
    %cst_138 = arith.constant 0.000000e+00 : f32
    %208 = vector.broadcast %cst_138 : f32 to vector<1x128xf32>
    %209 = arith.maximumf %207, %208 : vector<1x128xf32>
    %210 = arith.mulf %178, %195 : vector<1x128xf32>
    %211 = vector.broadcast %32 : f32 to vector<1x128xf32>
    %212 = arith.mulf %210, %211 : vector<1x128xf32>
    %213 = vector.broadcast %37 : f32 to vector<1x128xf32>
    %214 = arith.addf %212, %213 : vector<1x128xf32>
    %cst_139 = arith.constant 0.000000e+00 : f32
    %215 = vector.broadcast %cst_139 : f32 to vector<1x128xf32>
    %216 = arith.maximumf %214, %215 : vector<1x128xf32>
    %217 = arith.mulf %179, %195 : vector<1x128xf32>
    %218 = vector.broadcast %33 : f32 to vector<1x128xf32>
    %219 = arith.mulf %217, %218 : vector<1x128xf32>
    %220 = vector.broadcast %38 : f32 to vector<1x128xf32>
    %221 = arith.addf %219, %220 : vector<1x128xf32>
    %cst_140 = arith.constant 0.000000e+00 : f32
    %222 = vector.broadcast %cst_140 : f32 to vector<1x128xf32>
    %223 = arith.maximumf %221, %222 : vector<1x128xf32>
    %224 = arith.mulf %180, %195 : vector<1x128xf32>
    %225 = vector.broadcast %34 : f32 to vector<1x128xf32>
    %226 = arith.mulf %224, %225 : vector<1x128xf32>
    %227 = vector.broadcast %39 : f32 to vector<1x128xf32>
    %228 = arith.addf %226, %227 : vector<1x128xf32>
    %cst_141 = arith.constant 0.000000e+00 : f32
    %229 = vector.broadcast %cst_141 : f32 to vector<1x128xf32>
    %230 = arith.maximumf %228, %229 : vector<1x128xf32>
    %231 = vector.broadcast %40 : f32 to vector<1x128xf32>
    %232 = arith.mulf %202, %231 : vector<1x128xf32>
    %233 = vector.broadcast %65 : f32 to vector<1x128xf32>
    %234 = arith.addf %232, %233 : vector<1x128xf32>
    %235 = vector.broadcast %45 : f32 to vector<1x128xf32>
    %236 = arith.mulf %202, %235 : vector<1x128xf32>
    %237 = vector.broadcast %66 : f32 to vector<1x128xf32>
    %238 = arith.addf %236, %237 : vector<1x128xf32>
    %239 = vector.broadcast %50 : f32 to vector<1x128xf32>
    %240 = arith.mulf %202, %239 : vector<1x128xf32>
    %241 = vector.broadcast %67 : f32 to vector<1x128xf32>
    %242 = arith.addf %240, %241 : vector<1x128xf32>
    %243 = vector.broadcast %55 : f32 to vector<1x128xf32>
    %244 = arith.mulf %202, %243 : vector<1x128xf32>
    %245 = vector.broadcast %68 : f32 to vector<1x128xf32>
    %246 = arith.addf %244, %245 : vector<1x128xf32>
    %247 = vector.broadcast %60 : f32 to vector<1x128xf32>
    %248 = arith.mulf %202, %247 : vector<1x128xf32>
    %249 = vector.broadcast %69 : f32 to vector<1x128xf32>
    %250 = arith.addf %248, %249 : vector<1x128xf32>
    %251 = vector.broadcast %41 : f32 to vector<1x128xf32>
    %252 = arith.mulf %209, %251 : vector<1x128xf32>
    %253 = arith.addf %234, %252 : vector<1x128xf32>
    %254 = vector.broadcast %46 : f32 to vector<1x128xf32>
    %255 = arith.mulf %209, %254 : vector<1x128xf32>
    %256 = arith.addf %238, %255 : vector<1x128xf32>
    %257 = vector.broadcast %51 : f32 to vector<1x128xf32>
    %258 = arith.mulf %209, %257 : vector<1x128xf32>
    %259 = arith.addf %242, %258 : vector<1x128xf32>
    %260 = vector.broadcast %56 : f32 to vector<1x128xf32>
    %261 = arith.mulf %209, %260 : vector<1x128xf32>
    %262 = arith.addf %246, %261 : vector<1x128xf32>
    %263 = vector.broadcast %61 : f32 to vector<1x128xf32>
    %264 = arith.mulf %209, %263 : vector<1x128xf32>
    %265 = arith.addf %250, %264 : vector<1x128xf32>
    %266 = vector.broadcast %42 : f32 to vector<1x128xf32>
    %267 = arith.mulf %216, %266 : vector<1x128xf32>
    %268 = arith.addf %253, %267 : vector<1x128xf32>
    %269 = vector.broadcast %47 : f32 to vector<1x128xf32>
    %270 = arith.mulf %216, %269 : vector<1x128xf32>
    %271 = arith.addf %256, %270 : vector<1x128xf32>
    %272 = vector.broadcast %52 : f32 to vector<1x128xf32>
    %273 = arith.mulf %216, %272 : vector<1x128xf32>
    %274 = arith.addf %259, %273 : vector<1x128xf32>
    %275 = vector.broadcast %57 : f32 to vector<1x128xf32>
    %276 = arith.mulf %216, %275 : vector<1x128xf32>
    %277 = arith.addf %262, %276 : vector<1x128xf32>
    %278 = vector.broadcast %62 : f32 to vector<1x128xf32>
    %279 = arith.mulf %216, %278 : vector<1x128xf32>
    %280 = arith.addf %265, %279 : vector<1x128xf32>
    %281 = vector.broadcast %43 : f32 to vector<1x128xf32>
    %282 = arith.mulf %223, %281 : vector<1x128xf32>
    %283 = arith.addf %268, %282 : vector<1x128xf32>
    %284 = vector.broadcast %48 : f32 to vector<1x128xf32>
    %285 = arith.mulf %223, %284 : vector<1x128xf32>
    %286 = arith.addf %271, %285 : vector<1x128xf32>
    %287 = vector.broadcast %53 : f32 to vector<1x128xf32>
    %288 = arith.mulf %223, %287 : vector<1x128xf32>
    %289 = arith.addf %274, %288 : vector<1x128xf32>
    %290 = vector.broadcast %58 : f32 to vector<1x128xf32>
    %291 = arith.mulf %223, %290 : vector<1x128xf32>
    %292 = arith.addf %277, %291 : vector<1x128xf32>
    %293 = vector.broadcast %63 : f32 to vector<1x128xf32>
    %294 = arith.mulf %223, %293 : vector<1x128xf32>
    %295 = arith.addf %280, %294 : vector<1x128xf32>
    %296 = vector.broadcast %44 : f32 to vector<1x128xf32>
    %297 = arith.mulf %230, %296 : vector<1x128xf32>
    %298 = arith.addf %283, %297 : vector<1x128xf32>
    %299 = vector.broadcast %49 : f32 to vector<1x128xf32>
    %300 = arith.mulf %230, %299 : vector<1x128xf32>
    %301 = arith.addf %286, %300 : vector<1x128xf32>
    %302 = vector.broadcast %54 : f32 to vector<1x128xf32>
    %303 = arith.mulf %230, %302 : vector<1x128xf32>
    %304 = arith.addf %289, %303 : vector<1x128xf32>
    %305 = vector.broadcast %59 : f32 to vector<1x128xf32>
    %306 = arith.mulf %230, %305 : vector<1x128xf32>
    %307 = arith.addf %292, %306 : vector<1x128xf32>
    %308 = vector.broadcast %64 : f32 to vector<1x128xf32>
    %309 = arith.mulf %230, %308 : vector<1x128xf32>
    %310 = arith.addf %295, %309 : vector<1x128xf32>
    %c0_142 = arith.constant 0 : index
    %c0_143 = arith.constant 0 : index
    %c0_144 = arith.constant 0 : index
    %311 = vector.load %arg8[%c0_142, %c0_143, %c0_144] : memref<5x1x128xf32, #tpu.memory_space<vmem>>, vector<1x1x128xf32>
    %312 = vector.shape_cast %311 : vector<1x1x128xf32> to vector<1x128xf32>
    %313 = vector.shape_cast %298 : vector<1x128xf32> to vector<1x1x128xf32>
    tpu.vector_store %arg8[%c0_142, %c0_143, %c0_144], %313 {strides = array<i32>} : memref<5x1x128xf32, #tpu.memory_space<vmem>>, vector<1x1x128xf32>,
    %c1_145 = arith.constant 1 : index
    %c0_146 = arith.constant 0 : index
    %c0_147 = arith.constant 0 : index
    %314 = vector.load %arg8[%c1_145, %c0_146, %c0_147] : memref<5x1x128xf32, #tpu.memory_space<vmem>>, vector<1x1x128xf32>
    %315 = vector.shape_cast %314 : vector<1x1x128xf32> to vector<1x128xf32>
    %316 = vector.shape_cast %301 : vector<1x128xf32> to vector<1x1x128xf32>
    tpu.vector_store %arg8[%c1_145, %c0_146, %c0_147], %316 {strides = array<i32>} : memref<5x1x128xf32, #tpu.memory_space<vmem>>, vector<1x1x128xf32>,
    %c2_148 = arith.constant 2 : index
    %c0_149 = arith.constant 0 : index
    %c0_150 = arith.constant 0 : index
    %317 = vector.load %arg8[%c2_148, %c0_149, %c0_150] : memref<5x1x128xf32, #tpu.memory_space<vmem>>, vector<1x1x128xf32>
    %318 = vector.shape_cast %317 : vector<1x1x128xf32> to vector<1x128xf32>
    %319 = vector.shape_cast %304 : vector<1x128xf32> to vector<1x1x128xf32>
    tpu.vector_store %arg8[%c2_148, %c0_149, %c0_150], %319 {strides = array<i32>} : memref<5x1x128xf32, #tpu.memory_space<vmem>>, vector<1x1x128xf32>,
    %c3_151 = arith.constant 3 : index
    %c0_152 = arith.constant 0 : index
    %c0_153 = arith.constant 0 : index
    %320 = vector.load %arg8[%c3_151, %c0_152, %c0_153] : memref<5x1x128xf32, #tpu.memory_space<vmem>>, vector<1x1x128xf32>
    %321 = vector.shape_cast %320 : vector<1x1x128xf32> to vector<1x128xf32>
    %322 = vector.shape_cast %307 : vector<1x128xf32> to vector<1x1x128xf32>
    tpu.vector_store %arg8[%c3_151, %c0_152, %c0_153], %322 {strides = array<i32>} : memref<5x1x128xf32, #tpu.memory_space<vmem>>, vector<1x1x128xf32>,
    %c4_154 = arith.constant 4 : index
    %c0_155 = arith.constant 0 : index
    %c0_156 = arith.constant 0 : index
    %323 = vector.load %arg8[%c4_154, %c0_155, %c0_156] : memref<5x1x128xf32, #tpu.memory_space<vmem>>, vector<1x1x128xf32>
    %324 = vector.shape_cast %323 : vector<1x1x128xf32> to vector<1x128xf32>
    %325 = vector.shape_cast %310 : vector<1x128xf32> to vector<1x1x128xf32>
    tpu.vector_store %arg8[%c4_154, %c0_155, %c0_156], %325 {strides = array<i32>} : memref<5x1x128xf32, #tpu.memory_space<vmem>>, vector<1x1x128xf32>,
    return
  }
  func.func @transform_0(%arg0: i32) -> (i32, i32, i32) {
    %c0_i32 = arith.constant 0 : i32
    %c0_i32_0 = arith.constant 0 : i32
    %c0_i32_1 = arith.constant 0 : i32
    return %c0_i32, %arg0, %c0_i32_0 : i32, i32, i32
  }
  func.func @transform_1(%arg0: i32) -> (i32, i32) {
    %c0_i32 = arith.constant 0 : i32
    %c0_i32_0 = arith.constant 0 : i32
    %c0_i32_1 = arith.constant 0 : i32
    return %c0_i32, %c0_i32_0 : i32, i32
  }
  func.func @transform_2(%arg0: i32) -> i32 {
    %c0_i32 = arith.constant 0 : i32
    %c0_i32_0 = arith.constant 0 : i32
    return %c0_i32 : i32
  }
  func.func @transform_3(%arg0: i32) -> i32 {
    %c0_i32 = arith.constant 0 : i32
    %c0_i32_0 = arith.constant 0 : i32
    return %c0_i32 : i32
  }
  func.func @transform_4(%arg0: i32) -> i32 {
    %c0_i32 = arith.constant 0 : i32
    %c0_i32_0 = arith.constant 0 : i32
    return %c0_i32 : i32
  }
  func.func @transform_5(%arg0: i32) -> (i32, i32) {
    %c0_i32 = arith.constant 0 : i32
    %c0_i32_0 = arith.constant 0 : i32
    %c0_i32_1 = arith.constant 0 : i32
    return %c0_i32, %c0_i32_0 : i32, i32
  }
  func.func @transform_6(%arg0: i32) -> i32 {
    %c0_i32 = arith.constant 0 : i32
    %c0_i32_0 = arith.constant 0 : i32
    return %c0_i32 : i32
  }
  func.func @transform_7(%arg0: i32) -> (i32, i32, i32) {
    %c0_i32 = arith.constant 0 : i32
    %c0_i32_0 = arith.constant 0 : i32
    %c0_i32_1 = arith.constant 0 : i32
    return %c0_i32, %arg0, %c0_i32_0 : i32, i32, i32
  }
}

</mosaic_0001>

<llo_original>
// kernel: tpu_custom_call.1
$region0: #{tpu_custom_call.1}
  #allocation0 [shape = 'u32[]', space=smem, size = 0x4, offset = 0x4, fixed_abs, tag = 'smem constant byte address 0x4 - core index']
  #allocation1 [shape = 'u32[144,128]{1,0:T(1,128)}', space=vmem, size = 0x12000, scoped, tag = 'internal scratch']
  %s0 = inlined_call_operand.hbm [shape: f32[5,1,128], index: 0, kind: input, shape index: {}]
  %s1 = inlined_call_operand.hbm [shape: f32[5,5], index: 1, kind: input, shape index: {}]
  %s2 = inlined_call_operand.vmem [shape: f32[5], index: 2, kind: input, shape index: {}]
  %s3 = inlined_call_operand.vmem [shape: f32[5], index: 3, kind: input, shape index: {}]
  %s4 = inlined_call_operand.vmem [shape: f32[5], index: 4, kind: input, shape index: {}]
  %s5 = inlined_call_operand.vmem [shape: f32[5,5], index: 5, kind: input, shape index: {}]
  %s6 = inlined_call_operand.vmem [shape: f32[5], index: 6, kind: input, shape index: {}]
  %s7 = inlined_call_operand.hbm [shape: f32[5,1,128], index: 7, kind: output, shape index: {}]
  %s8 = sld [smem:[#allocation0]]
  $region66: #{tpu_custom_call.1} parent=0
    _
  %s10 = ssub.s32 1, %s8
  %s11 = scalar_select 0, %s10, %s8
  $region1: #{tpu_custom_call.1} parent=0
    #allocation2 [shape = 'u8[2560]{0}', space=vmem, size = 0xc00, scoped, tag = 'input window, operand 0, single buffered']
    #allocation3 [shape = 's32[1]{0}', space=sflag, size = 0x4, scoped, tag = 'scoped memory for tpu_custom_call.1']
    #allocation4 [shape = 's32[1]{0}', space=sflag, size = 0x4, scoped, tag = 'scoped memory for tpu_custom_call.1']
    #allocation5 [shape = 's32[1]{0}', space=sflag, size = 0x4, scoped, tag = 'scoped memory for tpu_custom_call.1']
    #allocation6 [shape = 's32[1]{0}', space=sflag, size = 0x4, scoped, tag = 'scoped memory for tpu_custom_call.1']
    #allocation7 [shape = 'u8[4096]{0}', space=smem, size = 0x1000, scoped, tag = 'input window, operand 1, single buffered']
    #allocation8 [shape = 'u8[512]{0}', space=smem, size = 0x200, scoped, tag = 'input window, operand 2, single buffered']
    #allocation9 [shape = 'u8[512]{0}', space=smem, size = 0x200, scoped, tag = 'input window, operand 3, single buffered']
    #allocation10 [shape = 's32[1]{0}', space=sflag, size = 0x4, scoped, tag = 'scoped memory for tpu_custom_call.1']
    #allocation11 [shape = 'u8[512]{0}', space=smem, size = 0x200, scoped, tag = 'input window, operand 4, single buffered']
    #allocation12 [shape = 'u8[4096]{0}', space=smem, size = 0x1000, scoped, tag = 'input window, operand 5, single buffered']
    #allocation13 [shape = 's32[1]{0}', space=sflag, size = 0x4, scoped, tag = 'scoped memory for tpu_custom_call.1']
    #allocation14 [shape = 'u8[512]{0}', space=smem, size = 0x200, scoped, tag = 'input window, operand 6, single buffered']
    #allocation15 [shape = 'u8[2560]{0}', space=vmem, size = 0xc00, scoped, tag = 'output window, operand 0, single buffered']
    %12 = vsyncpa [#allocation3], 0
    %13 = vsyncpa [#allocation5], 0
    %14 = vsyncpa [#allocation6], 0
    %15 = vsyncpa [#allocation10], 0
    %16 = vsyncpa [#allocation13], 0
    %17 = vsyncpa [#allocation4], 0
    // Predicated region
    $region2: #{tpu_custom_call.1} parent=1 // pred_check
      _
    $region3: #{tpu_custom_call.1} parent=1 // pred_check_branch
      %19 = sbr.rel (0) target = $region5
    $region4: #{tpu_custom_call.1} parent=1 // pred_region
      %s21 = ssub.s32 80, 80
      %22 = vsyncadd [#allocation3], %s21
      %s23 = sshll.u32 [#allocation2], 4
      %s24 = int_to_ptr.vmem [resolvable:$true] %s23
      %29 = dma.hbm_to_vmem [thread:$0]  %s0, 80, %s24, [#allocation3], 16, 16, 1
    $region5: #{tpu_custom_call.1} parent=1 // pred_fallthru
      _
    // Predicated region
    $region6: #{tpu_custom_call.1} parent=1 // pred_check
      _
    $region7: #{tpu_custom_call.1} parent=1 // pred_check_branch
      %31 = sbr.rel (0) target = $region9
    $region8: #{tpu_custom_call.1} parent=1 // pred_region
      %s33 = ssub.s32 128, 128
      %34 = vsyncadd [#allocation5], %s33
      %37 = dma.hbm_to_smem %s1, 128, [#allocation7], [#allocation5]
    $region9: #{tpu_custom_call.1} parent=1 // pred_fallthru
      _
    // Predicated region
    $region10: #{tpu_custom_call.1} parent=1 // pred_check
      _
    $region11: #{tpu_custom_call.1} parent=1 // pred_check_branch
      %39 = sbr.rel (0) target = $region13
    $region12: #{tpu_custom_call.1} parent=1 // pred_region
      %s41 = ssub.s32 16, 16
      %42 = vsyncadd [#allocation6], %s41
      %s44 = sshll.u32 %s2, 4
      %s45 = int_to_ptr.vmem [resolvable:$true] %s44
      %47 = dma.vmem_to_smem %s45, 16, [#allocation8], [#allocation6]
    $region13: #{tpu_custom_call.1} parent=1 // pred_fallthru
      _
    // Predicated region
    $region14: #{tpu_custom_call.1} parent=1 // pred_check
      _
    $region15: #{tpu_custom_call.1} parent=1 // pred_check_branch
      %49 = sbr.rel (0) target = $region17
    $region16: #{tpu_custom_call.1} parent=1 // pred_region
      %s51 = ssub.s32 16, 16
      %52 = vsyncadd [#allocation10], %s51
      %s54 = sshll.u32 %s3, 4
      %s55 = int_to_ptr.vmem [resolvable:$true] %s54
      %57 = dma.vmem_to_smem %s55, 16, [#allocation9], [#allocation10]
    $region17: #{tpu_custom_call.1} parent=1 // pred_fallthru
      _
    // Predicated region
    $region18: #{tpu_custom_call.1} parent=1 // pred_check
      _
    $region19: #{tpu_custom_call.1} parent=1 // pred_check_branch
      %59 = sbr.rel (0) target = $region21
    $region20: #{tpu_custom_call.1} parent=1 // pred_region
      %s61 = ssub.s32 16, 16
      %62 = vsyncadd [#allocation10], %s61
      %s64 = sshll.u32 %s4, 4
      %s65 = int_to_ptr.vmem [resolvable:$true] %s64
      %67 = dma.vmem_to_smem %s65, 16, [#allocation11], [#allocation10]
    $region21: #{tpu_custom_call.1} parent=1 // pred_fallthru
      _
    // Predicated region
    $region22: #{tpu_custom_call.1} parent=1 // pred_check
      _
    $region23: #{tpu_custom_call.1} parent=1 // pred_check_branch
      %69 = sbr.rel (0) target = $region25
    $region24: #{tpu_custom_call.1} parent=1 // pred_region
      %s71 = ssub.s32 128, 128
      %72 = vsyncadd [#allocation13], %s71
      %s74 = sshll.u32 %s5, 4
      %s75 = int_to_ptr.vmem [resolvable:$true] %s74
      %77 = dma.vmem_to_smem %s75, 128, [#allocation12], [#allocation13]
    $region25: #{tpu_custom_call.1} parent=1 // pred_fallthru
      _
    // Predicated region
    $region26: #{tpu_custom_call.1} parent=1 // pred_check
      _
    $region27: #{tpu_custom_call.1} parent=1 // pred_check_branch
      %79 = sbr.rel (0) target = $region29
    $region28: #{tpu_custom_call.1} parent=1 // pred_region
      %s81 = ssub.s32 16, 16
      %82 = vsyncadd [#allocation13], %s81
      %s84 = sshll.u32 %s6, 4
      %s85 = int_to_ptr.vmem [resolvable:$true] %s84
      %87 = dma.vmem_to_smem %s85, 16, [#allocation14], [#allocation13]
    $region29: #{tpu_custom_call.1} parent=1 // pred_fallthru
      _
    // Predicated region
    $region30: #{tpu_custom_call.1} parent=1 // pred_check
      _
    $region31: #{tpu_custom_call.1} parent=1 // pred_check_branch
      %89 = sbr.rel (0) target = $region33
    $region32: #{tpu_custom_call.1} parent=1 // pred_region
      %90 = dma.done [#allocation3], 80
    $region33: #{tpu_custom_call.1} parent=1 // pred_fallthru
      _
    // Predicated region
    $region34: #{tpu_custom_call.1} parent=1 // pred_check
      _
    $region35: #{tpu_custom_call.1} parent=1 // pred_check_branch
      %92 = sbr.rel (0) target = $region37
    $region36: #{tpu_custom_call.1} parent=1 // pred_region
      %93 = dma.done [#allocation5], 128
    $region37: #{tpu_custom_call.1} parent=1 // pred_fallthru
      _
    // Predicated region
    $region38: #{tpu_custom_call.1} parent=1 // pred_check
      _
    $region39: #{tpu_custom_call.1} parent=1 // pred_check_branch
      %95 = sbr.rel (0) target = $region41
    $region40: #{tpu_custom_call.1} parent=1 // pred_region
      %96 = dma.done [#allocation6], 16
    $region41: #{tpu_custom_call.1} parent=1 // pred_fallthru
      _
    // Predicated region
    $region42: #{tpu_custom_call.1} parent=1 // pred_check
      _
    $region43: #{tpu_custom_call.1} parent=1 // pred_check_branch
      %98 = sbr.rel (0) target = $region45
    $region44: #{tpu_custom_call.1} parent=1 // pred_region
      %99 = dma.done [#allocation10], 16
    $region45: #{tpu_custom_call.1} parent=1 // pred_fallthru
      _
    // Predicated region
    $region46: #{tpu_custom_call.1} parent=1 // pred_check
      _
    $region47: #{tpu_custom_call.1} parent=1 // pred_check_branch
      %101 = sbr.rel (0) target = $region49
    $region48: #{tpu_custom_call.1} parent=1 // pred_region
      %102 = dma.done [#allocation10], 16
    $region49: #{tpu_custom_call.1} parent=1 // pred_fallthru
      _
    // Predicated region
    $region50: #{tpu_custom_call.1} parent=1 // pred_check
      _
    $region51: #{tpu_custom_call.1} parent=1 // pred_check_branch
      %104 = sbr.rel (0) target = $region53
    $region52: #{tpu_custom_call.1} parent=1 // pred_region
      %105 = dma.done [#allocation13], 128
    $region53: #{tpu_custom_call.1} parent=1 // pred_fallthru
      _
    // Predicated region
    $region54: #{tpu_custom_call.1} parent=1 // pred_check
      _
    $region55: #{tpu_custom_call.1} parent=1 // pred_check_branch
      %107 = sbr.rel (0) target = $region57
    $region56: #{tpu_custom_call.1} parent=1 // pred_region
      %108 = dma.done [#allocation13], 16
    $region57: #{tpu_custom_call.1} parent=1 // pred_fallthru
      _
    %109 = sfence
    %s110 = sld [smem:[#allocation7]]
    %s111 = sld [smem:[#allocation7 + $0x1]]
    %s112 = sld [smem:[#allocation7 + $0x2]]
    %s113 = sld [smem:[#allocation7 + $0x3]]
    %s114 = sld [smem:[#allocation7 + $0x4]]
    %s115 = sld [smem:[#allocation7 + $0x80]]
    %s116 = sld [smem:[#allocation7 + $0x81]]
    %s117 = sld [smem:[#allocation7 + $0x82]]
    %s118 = sld [smem:[#allocation7 + $0x83]]
    %s119 = sld [smem:[#allocation7 + $0x84]]
    %s120 = sld [smem:[#allocation7 + $0x100]]
    %s121 = sld [smem:[#allocation7 + $0x101]]
    %s122 = sld [smem:[#allocation7 + $0x102]]
    %s123 = sld [smem:[#allocation7 + $0x103]]
    %s124 = sld [smem:[#allocation7 + $0x104]]
    %s125 = sld [smem:[#allocation7 + $0x180]]
    %s126 = sld [smem:[#allocation7 + $0x181]]
    %s127 = sld [smem:[#allocation7 + $0x182]]
    %s128 = sld [smem:[#allocation7 + $0x183]]
    %s129 = sld [smem:[#allocation7 + $0x184]]
    %s130 = sld [smem:[#allocation7 + $0x200]]
    %s131 = sld [smem:[#allocation7 + $0x201]]
    %s132 = sld [smem:[#allocation7 + $0x202]]
    %s133 = sld [smem:[#allocation7 + $0x203]]
    %s134 = sld [smem:[#allocation7 + $0x204]]
    %s135 = sld [smem:[#allocation8]]
    %s136 = sld [smem:[#allocation8 + $0x1]]
    %s137 = sld [smem:[#allocation8 + $0x2]]
    %s138 = sld [smem:[#allocation8 + $0x3]]
    %s139 = sld [smem:[#allocation8 + $0x4]]
    %s140 = sld [smem:[#allocation9]]
    %s141 = sld [smem:[#allocation9 + $0x1]]
    %s142 = sld [smem:[#allocation9 + $0x2]]
    %s143 = sld [smem:[#allocation9 + $0x3]]
    %s144 = sld [smem:[#allocation9 + $0x4]]
    %s145 = sld [smem:[#allocation11]]
    %s146 = sld [smem:[#allocation11 + $0x1]]
    %s147 = sld [smem:[#allocation11 + $0x2]]
    %s148 = sld [smem:[#allocation11 + $0x3]]
    %s149 = sld [smem:[#allocation11 + $0x4]]
    %s150 = sld [smem:[#allocation12]]
    %s151 = sld [smem:[#allocation12 + $0x1]]
    %s152 = sld [smem:[#allocation12 + $0x2]]
    %s153 = sld [smem:[#allocation12 + $0x3]]
    %s154 = sld [smem:[#allocation12 + $0x4]]
    %s155 = sld [smem:[#allocation12 + $0x80]]
    %s156 = sld [smem:[#allocation12 + $0x81]]
    %s157 = sld [smem:[#allocation12 + $0x82]]
    %s158 = sld [smem:[#allocation12 + $0x83]]
    %s159 = sld [smem:[#allocation12 + $0x84]]
    %s160 = sld [smem:[#allocation12 + $0x100]]
    %s161 = sld [smem:[#allocation12 + $0x101]]
    %s162 = sld [smem:[#allocation12 + $0x102]]
    %s163 = sld [smem:[#allocation12 + $0x103]]
    %s164 = sld [smem:[#allocation12 + $0x104]]
    %s165 = sld [smem:[#allocation12 + $0x180]]
    %s166 = sld [smem:[#allocation12 + $0x181]]
    %s167 = sld [smem:[#allocation12 + $0x182]]
    %s168 = sld [smem:[#allocation12 + $0x183]]
    %s169 = sld [smem:[#allocation12 + $0x184]]
    %s170 = sld [smem:[#allocation12 + $0x200]]
    %s171 = sld [smem:[#allocation12 + $0x201]]
    %s172 = sld [smem:[#allocation12 + $0x202]]
    %s173 = sld [smem:[#allocation12 + $0x203]]
    %s174 = sld [smem:[#allocation12 + $0x204]]
    %s175 = sld [smem:[#allocation14]]
    %s176 = sld [smem:[#allocation14 + $0x1]]
    %s177 = sld [smem:[#allocation14 + $0x2]]
    %s178 = sld [smem:[#allocation14 + $0x3]]
    %s179 = sld [smem:[#allocation14 + $0x4]]
    %v180 = vld [vmem:[#allocation2] sm:$0x1]
    %v181 = vstv %s110
    %v182 = vmul.f32 %v180, %v181
    %v183 = vstv %s135
    %v184 = vadd.f32 %v182, %v183
    %v185 = vstv %s115
    %v186 = vmul.f32 %v180, %v185
    %v187 = vstv %s136
    %v188 = vadd.f32 %v186, %v187
    %v189 = vstv %s120
    %v190 = vmul.f32 %v180, %v189
    %v191 = vstv %s137
    %v192 = vadd.f32 %v190, %v191
    %v193 = vstv %s125
    %v194 = vmul.f32 %v180, %v193
    %v195 = vstv %s138
    %v196 = vadd.f32 %v194, %v195
    %v197 = vstv %s130
    %v198 = vmul.f32 %v180, %v197
    %v199 = vstv %s139
    %v200 = vadd.f32 %v198, %v199
    %s201 = scalar_lea.vmem [#allocation2], 1
    %v202 = vld [vmem:[%s201] sm:$0x1]
    %v203 = vstv %s111
    %v204 = vmul.f32 %v202, %v203
    %v205 = vadd.f32 %v184, %v204
    %v206 = vstv %s116
    %v207 = vmul.f32 %v202, %v206
    %v208 = vadd.f32 %v188, %v207
    %v209 = vstv %s121
    %v210 = vmul.f32 %v202, %v209
    %v211 = vadd.f32 %v192, %v210
    %v212 = vstv %s126
    %v213 = vmul.f32 %v202, %v212
    %v214 = vadd.f32 %v196, %v213
    %v215 = vstv %s131
    %v216 = vmul.f32 %v202, %v215
    %v217 = vadd.f32 %v200, %v216
    %s218 = scalar_lea.vmem [#allocation2], 2
    %v219 = vld [vmem:[%s218] sm:$0x1]
    %v220 = vstv %s112
    %v221 = vmul.f32 %v219, %v220
    %v222 = vadd.f32 %v205, %v221
    %v223 = vstv %s117
    %v224 = vmul.f32 %v219, %v223
    %v225 = vadd.f32 %v208, %v224
    %v226 = vstv %s122
    %v227 = vmul.f32 %v219, %v226
    %v228 = vadd.f32 %v211, %v227
    %v229 = vstv %s127
    %v230 = vmul.f32 %v219, %v229
    %v231 = vadd.f32 %v214, %v230
    %v232 = vstv %s132
    %v233 = vmul.f32 %v219, %v232
    %v234 = vadd.f32 %v217, %v233
    %s235 = scalar_lea.vmem [#allocation2], 3
    %v236 = vld [vmem:[%s235] sm:$0x1]
    %v237 = vstv %s113
    %v238 = vmul.f32 %v236, %v237
    %v239 = vadd.f32 %v222, %v238
    %v240 = vstv %s118
    %v241 = vmul.f32 %v236, %v240
    %v242 = vadd.f32 %v225, %v241
    %v243 = vstv %s123
    %v244 = vmul.f32 %v236, %v243
    %v245 = vadd.f32 %v228, %v244
    %v246 = vstv %s128
    %v247 = vmul.f32 %v236, %v246
    %v248 = vadd.f32 %v231, %v247
    %v249 = vstv %s133
    %v250 = vmul.f32 %v236, %v249
    %v251 = vadd.f32 %v234, %v250
    %s252 = scalar_lea.vmem [#allocation2], 4
    %v253 = vld [vmem:[%s252] sm:$0x1]
    %v254 = vstv %s114
    %v255 = vmul.f32 %v253, %v254
    %v256 = vadd.f32 %v239, %v255
    %v257 = vstv %s119
    %v258 = vmul.f32 %v253, %v257
    %v259 = vadd.f32 %v242, %v258
    %v260 = vstv %s124
    %v261 = vmul.f32 %v253, %v260
    %v262 = vadd.f32 %v245, %v261
    %v263 = vstv %s129
    %v264 = vmul.f32 %v253, %v263
    %v265 = vadd.f32 %v248, %v264
    %v266 = vstv %s134
    %v267 = vmul.f32 %v253, %v266
    %v268 = vadd.f32 %v251, %v267
    %v269 = vmax.f32 %v256, 0.0
    %v270 = vmax.f32 %v259, 0.0
    %v271 = vmax.f32 %v262, 0.0
    %v272 = vmax.f32 %v265, 0.0
    %v273 = vmax.f32 %v268, 0.0
    %v274 = vadd.f32 %v269, %v270
    %v275 = vadd.f32 %v274, %v271
    %v276 = vadd.f32 %v275, %v272
    %v277 = vadd.f32 %v276, %v273
    %v278 = vmul.f32 %v277, 0.2
    %v279 = vsub.f32 %v269, %v278
    %v280 = vsub.f32 %v270, %v278
    %v281 = vsub.f32 %v271, %v278
    %v282 = vsub.f32 %v272, %v278
    %v283 = vsub.f32 %v273, %v278
    %v284 = vmul.f32 %v279, %v279
    %v285 = vmul.f32 %v280, %v280
    %v286 = vadd.f32 %v284, %v285
    %v287 = vmul.f32 %v281, %v281
    %v288 = vadd.f32 %v286, %v287
    %v289 = vmul.f32 %v282, %v282
    %v290 = vadd.f32 %v288, %v289
    %v291 = vmul.f32 %v283, %v283
    %v292 = vadd.f32 %v290, %v291
    %v293 = vmul.f32 %v292, 0.2
    %v294 = vrsqrt.pop %v293
    %v295 = vmul.f32 %v293, %v294
    %vm296 = vcmp.eq.f32.partialorder %v293, inf
    %v297 = vsel %vm296, %v293, %v295
    %vm298 = vcmp.eq.f32.partialorder %v293, 0.0
    %v299 = vand.u32 %v293, 2147483648
    %v300 = vsel %vm298, %v299, %v297
    %v301 = vadd.f32 %v300, 1e-06
    %v302 = vrcp.pop %v301
    %v303 = vmul.f32 %v279, %v302
    %v304 = vstv %s140
    %v305 = vmul.f32 %v303, %v304
    %v306 = vstv %s145
    %v307 = vadd.f32 %v305, %v306
    %v308 = vmax.f32 %v307, 0.0
    %v309 = vmul.f32 %v280, %v302
    %v310 = vstv %s141
    %v311 = vmul.f32 %v309, %v310
    %v312 = vstv %s146
    %v313 = vadd.f32 %v311, %v312
    %v314 = vmax.f32 %v313, 0.0
    %v315 = vmul.f32 %v281, %v302
    %v316 = vstv %s142
    %v317 = vmul.f32 %v315, %v316
    %v318 = vstv %s147
    %v319 = vadd.f32 %v317, %v318
    %v320 = vmax.f32 %v319, 0.0
    %v321 = vmul.f32 %v282, %v302
    %v322 = vstv %s143
    %v323 = vmul.f32 %v321, %v322
    %v324 = vstv %s148
    %v325 = vadd.f32 %v323, %v324
    %v326 = vmax.f32 %v325, 0.0
    %v327 = vmul.f32 %v283, %v302
    %v328 = vstv %s144
    %v329 = vmul.f32 %v327, %v328
    %v330 = vstv %s149
    %v331 = vadd.f32 %v329, %v330
    %v332 = vmax.f32 %v331, 0.0
    %v333 = vstv %s150
    %v334 = vmul.f32 %v308, %v333
    %v335 = vstv %s175
    %v336 = vadd.f32 %v334, %v335
    %v337 = vstv %s155
    %v338 = vmul.f32 %v308, %v337
    %v339 = vstv %s176
    %v340 = vadd.f32 %v338, %v339
    %v341 = vstv %s160
    %v342 = vmul.f32 %v308, %v341
    %v343 = vstv %s177
    %v344 = vadd.f32 %v342, %v343
    %v345 = vstv %s165
    %v346 = vmul.f32 %v308, %v345
    %v347 = vstv %s178
    %v348 = vadd.f32 %v346, %v347
    %v349 = vstv %s170
    %v350 = vmul.f32 %v308, %v349
    %v351 = vstv %s179
    %v352 = vadd.f32 %v350, %v351
    %v353 = vstv %s151
    %v354 = vmul.f32 %v314, %v353
    %v355 = vadd.f32 %v336, %v354
    %v356 = vstv %s156
    %v357 = vmul.f32 %v314, %v356
    %v358 = vadd.f32 %v340, %v357
    %v359 = vstv %s161
    %v360 = vmul.f32 %v314, %v359
    %v361 = vadd.f32 %v344, %v360
    %v362 = vstv %s166
    %v363 = vmul.f32 %v314, %v362
    %v364 = vadd.f32 %v348, %v363
    %v365 = vstv %s171
    %v366 = vmul.f32 %v314, %v365
    %v367 = vadd.f32 %v352, %v366
    %v368 = vstv %s152
    %v369 = vmul.f32 %v320, %v368
    %v370 = vadd.f32 %v355, %v369
    %v371 = vstv %s157
    %v372 = vmul.f32 %v320, %v371
    %v373 = vadd.f32 %v358, %v372
    %v374 = vstv %s162
    %v375 = vmul.f32 %v320, %v374
    %v376 = vadd.f32 %v361, %v375
    %v377 = vstv %s167
    %v378 = vmul.f32 %v320, %v377
    %v379 = vadd.f32 %v364, %v378
    %v380 = vstv %s172
    %v381 = vmul.f32 %v320, %v380
    %v382 = vadd.f32 %v367, %v381
    %v383 = vstv %s153
    %v384 = vmul.f32 %v326, %v383
    %v385 = vadd.f32 %v370, %v384
    %v386 = vstv %s158
    %v387 = vmul.f32 %v326, %v386
    %v388 = vadd.f32 %v373, %v387
    %v389 = vstv %s163
    %v390 = vmul.f32 %v326, %v389
    %v391 = vadd.f32 %v376, %v390
    %v392 = vstv %s168
    %v393 = vmul.f32 %v326, %v392
    %v394 = vadd.f32 %v379, %v393
    %v395 = vstv %s173
    %v396 = vmul.f32 %v326, %v395
    %v397 = vadd.f32 %v382, %v396
    %v398 = vstv %s154
    %v399 = vmul.f32 %v332, %v398
    %v400 = vadd.f32 %v385, %v399
    %v401 = vstv %s159
    %v402 = vmul.f32 %v332, %v401
    %v403 = vadd.f32 %v388, %v402
    %v404 = vstv %s164
    %v405 = vmul.f32 %v332, %v404
    %v406 = vadd.f32 %v391, %v405
    %v407 = vstv %s169
    %v408 = vmul.f32 %v332, %v407
    %v409 = vadd.f32 %v394, %v408
    %v410 = vstv %s174
    %v411 = vmul.f32 %v332, %v410
    %v412 = vadd.f32 %v397, %v411
    %413 = vst [vmem:[#allocation15] sm:$0x1] %v400
    %s414 = scalar_lea.vmem [#allocation15], 1
    %415 = vst [vmem:[%s414] sm:$0x1] %v403
    %s416 = scalar_lea.vmem [#allocation15], 2
    %417 = vst [vmem:[%s416] sm:$0x1] %v406
    %s418 = scalar_lea.vmem [#allocation15], 3
    %419 = vst [vmem:[%s418] sm:$0x1] %v409
    %s420 = scalar_lea.vmem [#allocation15], 4
    %421 = vst [vmem:[%s420] sm:$0x1] %v412
    // Predicated region
    $region58: #{tpu_custom_call.1} parent=1 // pred_check
      _
    $region59: #{tpu_custom_call.1} parent=1 // pred_check_branch
      %423 = sbr.rel (0) target = $region61
    $region60: #{tpu_custom_call.1} parent=1 // pred_region
      %s425 = ssub.s32 80, 80
      %426 = vsyncadd [#allocation4], %s425
      %s427 = sshll.u32 [#allocation15], 4
      %s428 = int_to_ptr.vmem [resolvable:$true] %s427
      %433 = dma.vmem_to_hbm [thread:$0]  %s428, 80, %s7, [#allocation4], 16, 16, 1
    $region61: #{tpu_custom_call.1} parent=1 // pred_fallthru
      _
    // Predicated region
    $region62: #{tpu_custom_call.1} parent=1 // pred_check
      _
    $region63: #{tpu_custom_call.1} parent=1 // pred_check_branch
      %435 = sbr.rel (0) target = $region65
    $region64: #{tpu_custom_call.1} parent=1 // pred_region
      %436 = dma.done [#allocation4], 80
    $region65: #{tpu_custom_call.1} parent=1 // pred_fallthru
      _
    %437 = vsyncpa [#allocation3], 1
    %438 = vsyncpa [#allocation4], 1
    %439 = vsyncpa [#allocation5], 1
    %440 = vsyncpa [#allocation6], 1
    %441 = vsyncpa [#allocation10], 1
    %442 = vsyncpa [#allocation13], 1

</llo_original>
